<compile_context>
chip_gen: v7x
topology: tpu7x:2x2x1
jax: 0.10.0
libtpu: 0.0.40
codegen_flags: <defaults>
</compile_context>

<pallas_src>
import functools

import jax
import jax.numpy as jnp
from jax.experimental import pallas as pl
from jax.experimental.pallas import tpu as pltpu

LANE = 128       # hidden dim is padded to one full lane tile
MIN_TILE = 8     # sublane tile
MAX_TILE = 512   # largest batch tile (amortizes per-grid-step overhead; ~KiB of VMEM)


def _mlp_softmax_kernel(x_ref, w1_ref, b1_ref, w2_ref, b2_ref, out_ref, *, in_size):
    # x_ref  : (sub, in_size)    real features only, no lane padding
    # w1_ref : (in_size, LANE)   columns >= hidden_size are 0
    # b1_ref : (1, LANE)         lanes   >= hidden_size are 0
    # w2_ref : (LANE, out_size)  rows    >= hidden_size are 0
    # b2_ref : (1, out_size)
    # out_ref: (sub, out_size)
    x = x_ref[...]
    w1 = w1_ref[...]

    # Layer 1 + bias.  K = in_size is tiny and static, so unrolled VPU broadcast-MACs
    # beat streaming a 128x128 weight push through the MXU for a K=2 contraction.
    # Padded hidden lanes are 0 + 0 -> stay exactly 0 after ReLU.
    h = b1_ref[...]                                    # (1, LANE), broadcasts up
    for k in range(in_size):                           # unrolled (in_size is static)
        h = h + x[:, k:k + 1] * w1[k:k + 1, :]         # (sub,1) * (1,LANE)
    h = jnp.maximum(h, 0.0)                            # (sub, LANE)

    # Layer 2 on the MXU: aligned K=128 contraction, lane-narrow result.
    logits = jnp.dot(h, w2_ref[...], preferred_element_type=jnp.float32) + b2_ref[...]

    # Exact softmax over the (all-real) output lanes.
    m = jnp.max(logits, axis=-1, keepdims=True)
    e = jnp.exp(logits - m)
    s = jnp.sum(e, axis=-1, keepdims=True)
    out_ref[...] = (e / s).astype(out_ref.dtype)


def make_two_layer_net(w1, b1, w2, b2):
    """Pack / pad the parameters ONCE (hoisted) and return a jitted forward(x)."""
    in_size, hidden_size = w1.shape
    out_size = w2.shape[1]
    assert in_size <= LANE and hidden_size <= LANE and out_size <= LANE

    # One-time padding of the hidden dim to 128 lanes.  Everything outside the real
    # weights is explicitly zero (required so ReLU passes exact zeros to layer 2).
    w1p = jnp.zeros((in_size, LANE), jnp.float32).at[:, :hidden_size].set(
        w1.astype(jnp.float32))
    b1p = jnp.zeros((1, LANE), jnp.float32).at[0, :hidden_size].set(
        b1.astype(jnp.float32))
    w2p = jnp.zeros((LANE, out_size), jnp.float32).at[:hidden_size, :].set(
        w2.astype(jnp.float32))
    b2p = b2.astype(jnp.float32).reshape(1, out_size)

    kernel = functools.partial(_mlp_softmax_kernel, in_size=in_size)

    @jax.jit
    def forward(x):
        """x: (in,) single sample (matches the torch module) or (B, in) batch."""
        single = x.ndim == 1
        xb = (x[None, :] if single else x).astype(jnp.float32)
        batch = xb.shape[0]

        # Adaptive batch tile (all static at trace time):
        #  - tiny batches: one block covering the whole batch (no padding at all)
        #  - big batches: up to MAX_TILE rows per block, but capped so the grid keeps
        #    >= 2 blocks (v7x has 2 TensorCores; "parallel" axis shards across them).
        if batch <= MIN_TILE:
            sub = batch
        else:
            half = pl.cdiv(batch, 2)
            sub = min(MAX_TILE, ((half + MIN_TILE - 1) // MIN_TILE) * MIN_TILE)
        nblk = pl.cdiv(batch, sub)
        bpad = nblk * sub
        if bpad != batch:   # only a tiny row pad (in_size floats per row), rare case
            xb = jnp.zeros((bpad, in_size), jnp.float32).at[:batch].set(xb)

        out_p = pl.pallas_call(
            kernel,
            out_shape=jax.ShapeDtypeStruct((bpad, out_size), jnp.float32),
            grid=(nblk,),
            in_specs=[
                pl.BlockSpec((sub, in_size), lambda i: (i, 0)),
                pl.BlockSpec((in_size, LANE), lambda i: (0, 0)),   # resident
                pl.BlockSpec((1, LANE), lambda i: (0, 0)),         # resident
                pl.BlockSpec((LANE, out_size), lambda i: (0, 0)),  # resident
                pl.BlockSpec((1, out_size), lambda i: (0, 0)),     # resident
            ],
            out_specs=pl.BlockSpec((sub, out_size), lambda i: (i, 0)),
            compiler_params=pltpu.CompilerParams(
                dimension_semantics=("parallel",)),   # batch blocks shard across TCs
        )(xb, w1p, b1p, w2p, b2p)

        out = out_p if bpad == batch else out_p[:batch]
        return out[0] if single else out

    return forward


def init_params(key, input_size, hidden_size, output_size):
    """Deterministic init mimicking nn.Linear's default U(-1/sqrt(fan_in), +)."""
    k1, k2, k3, k4 = jax.random.split(key, 4)
    bound1 = 1.0 / jnp.sqrt(input_size)
    bound2 = 1.0 / jnp.sqrt(hidden_size)
    w1 = jax.random.uniform(k1, (input_size, hidden_size), jnp.float32, -bound1, bound1)
    b1 = jax.random.uniform(k2, (hidden_size,), jnp.float32, -bound1, bound1)
    w2 = jax.random.uniform(k3, (hidden_size, output_size), jnp.float32, -bound2, bound2)
    b2 = jax.random.uniform(k4, (output_size,), jnp.float32, -bound2, bound2)
    return w1, b1, w2, b2


def _reference(x, w1, b1, w2, b2):
    # Exact f32 reference (HIGHEST precision so XLA doesn't downcast the dots).
    hp = jax.lax.Precision.HIGHEST
    h = jnp.maximum(jnp.dot(x, w1, precision=hp) + b1, 0.0)
    return jax.nn.softmax(jnp.dot(h, w2, precision=hp) + b2, axis=-1)


if __name__ == "__main__":
    input_size, hidden_size, output_size = 2, 5, 3
    key = jax.random.PRNGKey(0)
    w1, b1, w2, b2 = init_params(key, input_size, hidden_size, output_size)

    net = make_two_layer_net(w1, b1, w2, b2)

    # Single sample, exactly like the torch spec: x = torch.Tensor([1, 1]).
    x = jnp.ones((input_size,), jnp.float32)
    p = jax.block_until_ready(net(x))
    p_ref = _reference(x, w1, b1, w2, b2)
    assert p.shape == (output_size,)
    assert jnp.allclose(p, p_ref, rtol=1e-4, atol=1e-6), (p, p_ref)
    assert jnp.allclose(jnp.sum(p), 1.0, rtol=1e-5, atol=1e-6)

    # Batched path (16 samples -> 2 grid blocks on the "parallel" axis).
    xb = jax.random.normal(jax.random.PRNGKey(1), (16, input_size), jnp.float32)
    pb = jax.block_until_ready(net(xb))
    pb_ref = _reference(xb, w1, b1, w2, b2)
    assert pb.shape == (16, output_size)
    assert jnp.allclose(pb, pb_ref, rtol=1e-4, atol=1e-6), (pb, pb_ref)

    print("KERNEL_OK")
</pallas_src>

<mosaic_0001>
module attributes {stable_mosaic.version = 11 : i64} {
  func.func @_mlp_softmax_kernel(%arg0: i32, %arg1: memref<1x2xf32, #tpu.memory_space<vmem>>, %arg2: memref<2x128xf32, #tpu.memory_space<vmem>>, %arg3: memref<1x128xf32, #tpu.memory_space<vmem>>, %arg4: memref<128x3xf32, #tpu.memory_space<vmem>>, %arg5: memref<1x3xf32, #tpu.memory_space<vmem>>, %arg6: memref<1x3xf32, #tpu.memory_space<vmem>>) attributes {dimension_semantics = [#tpu.dimension_semantics<parallel>], iteration_bounds = array<i64: 1>, scalar_prefetch = 0 : i64, scratch_operands = 0 : i64, tpu.core_type = #tpu.core_type<tc>, window_params = [{transform_indices = @transform_0, window_bounds = array<i64: 1, 2>}, {pipeline_mode = #tpu.pipeline_mode<synchronous>, transform_indices = @transform_1, window_bounds = array<i64: 2, 128>}, {pipeline_mode = #tpu.pipeline_mode<synchronous>, transform_indices = @transform_2, window_bounds = array<i64: 1, 128>}, {pipeline_mode = #tpu.pipeline_mode<synchronous>, transform_indices = @transform_3, window_bounds = array<i64: 128, 3>}, {pipeline_mode = #tpu.pipeline_mode<synchronous>, transform_indices = @transform_4, window_bounds = array<i64: 1, 3>}, {transform_indices = @transform_5, window_bounds = array<i64: 1, 3>}]} {
    %c0 = arith.constant 0 : index
    %c0_0 = arith.constant 0 : index
    %0 = vector.load %arg1[%c0, %c0_0] : memref<1x2xf32, #tpu.memory_space<vmem>>, vector<1x2xf32>
    %c0_1 = arith.constant 0 : index
    %c0_2 = arith.constant 0 : index
    %1 = vector.load %arg2[%c0_1, %c0_2] : memref<2x128xf32, #tpu.memory_space<vmem>>, vector<2x128xf32>
    %c0_3 = arith.constant 0 : index
    %c0_4 = arith.constant 0 : index
    %2 = vector.load %arg3[%c0_3, %c0_4] : memref<1x128xf32, #tpu.memory_space<vmem>>, vector<1x128xf32>
    %3 = vector.extract_strided_slice %0 {offsets = [0, 0], sizes = [1, 1], strides = [1, 1]} : vector<1x2xf32> to vector<1x1xf32>
    %4 = vector.extract_strided_slice %1 {offsets = [0, 0], sizes = [1, 128], strides = [1, 1]} : vector<2x128xf32> to vector<1x128xf32>
    %5 = vector.broadcast %3 : vector<1x1xf32> to vector<1x128xf32>
    %6 = arith.mulf %5, %4 : vector<1x128xf32>
    %7 = arith.addf %2, %6 : vector<1x128xf32>
    %8 = vector.extract_strided_slice %0 {offsets = [0, 1], sizes = [1, 1], strides = [1, 1]} : vector<1x2xf32> to vector<1x1xf32>
    %9 = vector.extract_strided_slice %1 {offsets = [1, 0], sizes = [1, 128], strides = [1, 1]} : vector<2x128xf32> to vector<1x128xf32>
    %10 = vector.broadcast %8 : vector<1x1xf32> to vector<1x128xf32>
    %11 = arith.mulf %10, %9 : vector<1x128xf32>
    %12 = arith.addf %7, %11 : vector<1x128xf32>
    %cst = arith.constant 0.000000e+00 : f32
    %13 = vector.broadcast %cst : f32 to vector<1x128xf32>
    %14 = arith.maximumf %12, %13 : vector<1x128xf32>
    %c0_5 = arith.constant 0 : index
    %c0_6 = arith.constant 0 : index
    %15 = vector.load %arg4[%c0_5, %c0_6] : memref<128x3xf32, #tpu.memory_space<vmem>>, vector<128x3xf32>
    %cst_7 = arith.constant dense<0.000000e+00> : vector<1x3xf32>
    %16 = tpu.matmul %14, %15, %cst_7 {dimension_numbers = #tpu.dot_dimension_numbers<[1], [0], [0], [1], [0, 0, 1, 1], [], []>} : vector<1x128xf32>, vector<128x3xf32>, vector<1x3xf32> -> vector<1x3xf32>
    %c0_8 = arith.constant 0 : index
    %c0_9 = arith.constant 0 : index
    %17 = vector.load %arg5[%c0_8, %c0_9] : memref<1x3xf32, #tpu.memory_space<vmem>>, vector<1x3xf32>
    %18 = arith.addf %16, %17 : vector<1x3xf32>
    %cst_10 = arith.constant dense<0xFF800000> : vector<1xf32>
    %19 = vector.multi_reduction <maximumf>, %18, %cst_10 [1] : vector<1x3xf32> to vector<1xf32>
    %20 = vector.shape_cast %19 : vector<1xf32> to vector<1x1xf32>
    %21 = vector.broadcast %20 : vector<1x1xf32> to vector<1x3xf32>
    %22 = arith.subf %18, %21 : vector<1x3xf32>
    %23 = math.exp %22 : vector<1x3xf32>
    %cst_11 = arith.constant dense<0.000000e+00> : vector<1xf32>
    %24 = vector.multi_reduction <add>, %23, %cst_11 [1] : vector<1x3xf32> to vector<1xf32>
    %25 = vector.shape_cast %24 : vector<1xf32> to vector<1x1xf32>
    %26 = vector.broadcast %25 : vector<1x1xf32> to vector<1x3xf32>
    %27 = arith.divf %23, %26 : vector<1x3xf32>
    %c0_12 = arith.constant 0 : index
    %c0_13 = arith.constant 0 : index
    %28 = vector.load %arg6[%c0_12, %c0_13] : memref<1x3xf32, #tpu.memory_space<vmem>>, vector<1x3xf32>
    tpu.vector_store %arg6[%c0_12, %c0_13], %27 {strides = array<i32>} : memref<1x3xf32, #tpu.memory_space<vmem>>, vector<1x3xf32>,
    return
  }
  func.func @transform_0(%arg0: i32) -> (i32, i32) {
    %c0_i32 = arith.constant 0 : i32
    %c0_i32_0 = arith.constant 0 : i32
    return %arg0, %c0_i32 : i32, i32
  }
  func.func @transform_1(%arg0: i32) -> (i32, i32) {
    %c0_i32 = arith.constant 0 : i32
    %c0_i32_0 = arith.constant 0 : i32
    %c0_i32_1 = arith.constant 0 : i32
    return %c0_i32, %c0_i32_0 : i32, i32
  }
  func.func @transform_2(%arg0: i32) -> (i32, i32) {
    %c0_i32 = arith.constant 0 : i32
    %c0_i32_0 = arith.constant 0 : i32
    %c0_i32_1 = arith.constant 0 : i32
    return %c0_i32, %c0_i32_0 : i32, i32
  }
  func.func @transform_3(%arg0: i32) -> (i32, i32) {
    %c0_i32 = arith.constant 0 : i32
    %c0_i32_0 = arith.constant 0 : i32
    %c0_i32_1 = arith.constant 0 : i32
    return %c0_i32, %c0_i32_0 : i32, i32
  }
  func.func @transform_4(%arg0: i32) -> (i32, i32) {
    %c0_i32 = arith.constant 0 : i32
    %c0_i32_0 = arith.constant 0 : i32
    %c0_i32_1 = arith.constant 0 : i32
    return %c0_i32, %c0_i32_0 : i32, i32
  }
  func.func @transform_5(%arg0: i32) -> (i32, i32) {
    %c0_i32 = arith.constant 0 : i32
    %c0_i32_0 = arith.constant 0 : i32
    return %arg0, %c0_i32 : i32, i32
  }
}

</mosaic_0001>

<llo_original>
// kernel: forward.1
$region0: #{forward.1}
  #allocation0 [shape = 'u32[]', space=smem, size = 0x4, offset = 0x4, fixed_abs, tag = 'smem constant byte address 0x4 - core index']
  #allocation1 [shape = 'u32[144,128]{1,0:T(1,128)}', space=vmem, size = 0x12000, scoped, tag = 'internal scratch']
  %s0 = inlined_call_operand.vmem [shape: f32[1,2], index: 0, kind: input, shape index: {}]
  %s1 = inlined_call_operand.vmem [shape: f32[2,128], index: 1, kind: input, shape index: {}]
  %s2 = inlined_call_operand.vmem [shape: f32[1,128], index: 2, kind: input, shape index: {}]
  %s3 = inlined_call_operand.hbm [shape: f32[128,3], index: 3, kind: input, shape index: {}]
  %s4 = inlined_call_operand.vmem [shape: f32[1,3], index: 4, kind: input, shape index: {}]
  %s5 = inlined_call_operand.hbm [shape: f32[1,3], index: 5, kind: output, shape index: {}]
  %s6 = sld [smem:[#allocation0]]
  $region34: #{forward.1} parent=0
    _
  %s8 = ssub.s32 1, %s6
  %s9 = scalar_select 0, %s8, %s6
  $region1: #{forward.1} parent=0
    #allocation2 [shape = 'u8[65536]{0}', space=vmem, size = 0x10000, scoped, tag = 'input window, operand 3, single buffered']
    #allocation3 [shape = 's32[1]{0}', space=sflag, size = 0x4, scoped, tag = 'scoped memory for forward.1']
    #allocation4 [shape = 's32[1]{0}', space=sflag, size = 0x4, scoped, tag = 'scoped memory for forward.1']
    #allocation5 [shape = 'u8[512]{0}', space=vmem, size = 0x400, scoped, tag = 'output window, operand 0, single buffered']
    %10 = vsyncpa [#allocation3], 0
    %11 = vsyncpa [#allocation4], 0
    // Predicated region
    $region2: #{forward.1} parent=1 // pred_check
      _
    $region3: #{forward.1} parent=1 // pred_check_branch
      %13 = sbr.rel (0) target = $region5
    $region4: #{forward.1} parent=1 // pred_region
      _
    $region5: #{forward.1} parent=1 // pred_fallthru
      _
    // Predicated region
    $region6: #{forward.1} parent=1 // pred_check
      _
    $region7: #{forward.1} parent=1 // pred_check_branch
      %15 = sbr.rel (0) target = $region9
    $region8: #{forward.1} parent=1 // pred_region
      _
    $region9: #{forward.1} parent=1 // pred_fallthru
      _
    // Predicated region
    $region10: #{forward.1} parent=1 // pred_check
      _
    $region11: #{forward.1} parent=1 // pred_check_branch
      %17 = sbr.rel (0) target = $region13
    $region12: #{forward.1} parent=1 // pred_region
      _
    $region13: #{forward.1} parent=1 // pred_fallthru
      _
    // Predicated region
    $region14: #{forward.1} parent=1 // pred_check
      _
    $region15: #{forward.1} parent=1 // pred_check_branch
      %19 = sbr.rel (0) target = $region17
    $region16: #{forward.1} parent=1 // pred_region
      %s21 = ssub.s32 2048, 2048
      %22 = vsyncadd [#allocation3], %s21
      %s23 = sshll.u32 [#allocation2], 4
      %s24 = int_to_ptr.vmem [resolvable:$true] %s23
      %29 = dma.hbm_to_vmem [thread:$0]  %s3, 2048, %s24, [#allocation3], 128, 128, 8
    $region17: #{forward.1} parent=1 // pred_fallthru
      _
    // Predicated region
    $region18: #{forward.1} parent=1 // pred_check
      _
    $region19: #{forward.1} parent=1 // pred_check_branch
      %31 = sbr.rel (0) target = $region21
    $region20: #{forward.1} parent=1 // pred_region
      _
    $region21: #{forward.1} parent=1 // pred_fallthru
      _
    // Predicated region
    $region22: #{forward.1} parent=1 // pred_check
      _
    $region23: #{forward.1} parent=1 // pred_check_branch
      %33 = sbr.rel (0) target = $region25
    $region24: #{forward.1} parent=1 // pred_region
      %34 = dma.done [#allocation3], 2048
    $region25: #{forward.1} parent=1 // pred_fallthru
      _
    %v35 = vld [vmem:[%s0] sm:$0x1]
    %v36 = vld [vmem:[%s1] sm:$0x3]
    %v37 = vld [vmem:[%s2] sm:$0x1]
    %39 = vset.pattern.permute.xlu0 0
    %40 = vperm.xlu0 %39, %v35
    %v41 = vpop.permute.xlu0 %40
    %v43 = vlaneseq
    %v44 = vshrl.u32 %v43, 7
    %v45 = vsub.s32 0, %v44
    %v46 = vrot.slane %v41, %v45
    %v47 = vmul.f32 %v46, %v36
    %v48 = vadd.f32 %v37, %v47
    %49 = vset.pattern.permute.xlu0 1
    %50 = vperm.xlu0 %49, %v35
    %v51 = vpop.permute.xlu0 %50
    %v53 = vlaneseq
    %v54 = vshrl.u32 %v53, 7
    %v55 = vsub.s32 0, %v54
    %v56 = vrot.slane %v51, %v55
    %v57 = vmul.f32 %v56, %v36
    %v60 = vunpack.c.l.s4 1966171168
    %v61 = vunpack.c.0.s8 %v60
    %v62 = vlaneseq
    %v63 = vshrl.u32 %v62, 7
    %v64 = vsub.s32 %v61, %v63
    %v65 = vrot.slane %v57, %v64
    %v66 = vcombine.high %v65, %v65
    %v68 = vunpack.c.l.s4 1966171168
    %v69 = vunpack.c.0.s8 %v68
    %v70 = vlaneseq
    %v71 = vshrl.u32 %v70, 7
    %v72 = vsub.s32 %v69, %v71
    %v73 = vrot.slane %v66, %v72
    %v75 = vadd.f32 %v48, %v73
    %v76 = vmax.f32 %v75, 0.0
    %v77 = vld [vmem:[#allocation2] sm:$0xff]
    %v78 = vld [vmem:[#allocation2 + $0x8] sm:$0xff]
    %v79 = vld [vmem:[#allocation2 + $0x10] sm:$0xff]
    %v80 = vld [vmem:[#allocation2 + $0x18] sm:$0xff]
    %v81 = vld [vmem:[#allocation2 + $0x20] sm:$0xff]
    %v82 = vld [vmem:[#allocation2 + $0x28] sm:$0xff]
    %v83 = vld [vmem:[#allocation2 + $0x30] sm:$0xff]
    %v84 = vld [vmem:[#allocation2 + $0x38] sm:$0xff]
    %v85 = vld [vmem:[#allocation2 + $0x40] sm:$0xff]
    %v86 = vld [vmem:[#allocation2 + $0x48] sm:$0xff]
    %v87 = vld [vmem:[#allocation2 + $0x50] sm:$0xff]
    %v88 = vld [vmem:[#allocation2 + $0x58] sm:$0xff]
    %v89 = vld [vmem:[#allocation2 + $0x60] sm:$0xff]
    %v90 = vld [vmem:[#allocation2 + $0x68] sm:$0xff]
    %v91 = vld [vmem:[#allocation2 + $0x70] sm:$0xff]
    %v92 = vld [vmem:[#allocation2 + $0x78] sm:$0xff]
    %v93 = vld [vmem:[%s4] sm:$0x1]
    %94 = vmatprep.subr.mxu0 0.0
    %95 = vmatpush1.msra.mxu0 %v77
    %96 = vmatprep.subr.mxu0 0.0
    %97 = vmatpush1.msra.mxu0 %v78
    %98 = vmatprep.subr.mxu0 0.0
    %99 = vmatpush1.msra.mxu0 %v79
    %100 = vmatprep.subr.mxu0 0.0
    %101 = vmatpush1.msra.mxu0 %v80
    %102 = vmatprep.subr.mxu0 0.0
    %103 = vmatpush1.msra.mxu0 %v81
    %104 = vmatprep.subr.mxu0 0.0
    %105 = vmatpush1.msra.mxu0 %v82
    %106 = vmatprep.subr.mxu0 0.0
    %107 = vmatpush1.msra.mxu0 %v83
    %108 = vmatprep.subr.mxu0 0.0
    %109 = vmatpush1.msra.mxu0 %v84
    %110 = vmatprep.subr.mxu0 0.0
    %111 = vmatpush1.msra.mxu0 %v85
    %112 = vmatprep.subr.mxu0 0.0
    %113 = vmatpush1.msra.mxu0 %v86
    %114 = vmatprep.subr.mxu0 0.0
    %115 = vmatpush1.msra.mxu0 %v87
    %116 = vmatprep.subr.mxu0 0.0
    %117 = vmatpush1.msra.mxu0 %v88
    %118 = vmatprep.subr.mxu0 0.0
    %119 = vmatpush1.msra.mxu0 %v89
    %120 = vmatprep.subr.mxu0 0.0
    %121 = vmatpush1.msra.mxu0 %v90
    %122 = vmatprep.subr.mxu0 0.0
    %123 = vmatpush1.msra.mxu0 %v91
    %124 = vmatprep.subr.mxu0 0.0
    %125 = vmatpush1.msra.mxu0 %v92
    %126 = vmatprep.subr.mxu0 0.0
    %127 = vmatpush1.msra.mxu0 0.0
    %128 = vmatprep.subr.mxu0 0.0
    %129 = vmatpush1.msra.mxu0 0.0
    %130 = vmatprep.subr.mxu0 0.0
    %131 = vmatpush1.msra.mxu0 0.0
    %132 = vmatprep.subr.mxu0 0.0
    %133 = vmatpush1.msra.mxu0 0.0
    %134 = vmatprep.subr.mxu0 0.0
    %135 = vmatpush1.msra.mxu0 0.0
    %136 = vmatprep.subr.mxu0 0.0
    %137 = vmatpush1.msra.mxu0 0.0
    %138 = vmatprep.subr.mxu0 0.0
    %139 = vmatpush1.msra.mxu0 0.0
    %140 = vmatprep.subr.mxu0 0.0
    %141 = vmatpush1.msra.mxu0 0.0
    %142 = vmatprep.subr.mxu0 0.0
    %143 = vmatpush1.msra.mxu0 0.0
    %144 = vmatprep.subr.mxu0 0.0
    %145 = vmatpush1.msra.mxu0 0.0
    %146 = vmatprep.subr.mxu0 0.0
    %147 = vmatpush1.msra.mxu0 0.0
    %148 = vmatprep.subr.mxu0 0.0
    %149 = vmatpush1.msra.mxu0 0.0
    %150 = vmatprep.subr.mxu0 0.0
    %151 = vmatpush1.msra.mxu0 0.0
    %152 = vmatprep.subr.mxu0 0.0
    %153 = vmatpush1.msra.mxu0 0.0
    %154 = vmatprep.subr.mxu0 0.0
    %155 = vmatpush1.msra.mxu0 0.0
    %156 = vmatprep.subr.mxu0 0.0
    %157 = vmatpush1.msra.mxu0 0.0
    %158 = vmatprep.mubr.f32.mxu0 0.0
    %159 = vmatmul.mubr.f32.gmra.mrb[0].mxu0 %v76
    %v160 = vpop.f32.mrb[0].mxu0
    %v161 = vadd.f32 %v93, %v160
    %v162 = vpop.f32.mrb[0].mxu0
    %163 = vdwg.mxu0
    %vm164 = vcmask 16384
    %v165 = vsel %vm164, %v161, -inf
    %166 = vmax.xlane.f32.xlu0 %v165
    %v167 = vpop.xlane.xlu0 %166
    %v168 = vsub.f32 %v161, %v167
    %v169 = vmul.f32 %v168, 1.442695
    %v170 = vpow.pop %v169
    %v171 = vsel %vm164, %v170, 0.0
    %172 = vadd.xlane.f32.xlu0 %v171
    %v173 = vpop.xlane.xlu0 %172
    %v174 = vrcp.pop %v173
    %v175 = vmul.f32 %v170, %v174
    %176 = vst.msk [vmem:[#allocation5] sm:$0x1] %vm164, %v175
    // Predicated region
    $region26: #{forward.1} parent=1 // pred_check
      _
    $region27: #{forward.1} parent=1 // pred_check_branch
      %178 = sbr.rel (0) target = $region29
    $region28: #{forward.1} parent=1 // pred_region
      %s180 = ssub.s32 16, 16
      %181 = vsyncadd [#allocation4], %s180
      %s183 = sshll.u32 [#allocation5], 4
      %s184 = int_to_ptr.vmem [resolvable:$true] %s183
      %186 = dma.vmem_to_hbm [thread:$0]  %s184, 16, %s5, [#allocation4]
    $region29: #{forward.1} parent=1 // pred_fallthru
      _
    // Predicated region
    $region30: #{forward.1} parent=1 // pred_check
      _
    $region31: #{forward.1} parent=1 // pred_check_branch
      %188 = sbr.rel (0) target = $region33
    $region32: #{forward.1} parent=1 // pred_region
      %189 = dma.done [#allocation4], 16
    $region33: #{forward.1} parent=1 // pred_fallthru
      _
    %190 = vsyncpa [#allocation3], 1
    %191 = vsyncpa [#allocation4], 1

</llo_original>
